<compile_context>
chip_gen: v7x
topology: tpu7x:2x2x1
jax: 0.10.0
libtpu: 0.0.40
codegen_flags: <defaults>
</compile_context>

<pallas_src>
import functools
import math

import jax
import jax.numpy as jnp
from jax.experimental import pallas as pl
from jax.experimental.pallas import tpu as pltpu


# ---------------------------------------------------------------------------
# Parameter / buffer setup (matches PositionalEncoding.__init__)
# ---------------------------------------------------------------------------
def make_positional_encoder(max_length: int, hidden_dims: int) -> jnp.ndarray:
    """Returns the (max_length, hidden_dims) sinusoidal table (float32)."""
    assert hidden_dims % 2 == 0, "hidden_dims must be even"
    position = jnp.arange(0, max_length, dtype=jnp.float32)[:, None]          # (L, 1)
    div_term = jnp.exp(
        jnp.arange(0, hidden_dims, 2, dtype=jnp.float32)
        * (-math.log(10000.0) / hidden_dims)
    )                                                                          # (H/2,)
    pe = jnp.zeros((max_length, hidden_dims), dtype=jnp.float32)
    pe = pe.at[:, 0::2].set(jnp.sin(position * div_term))
    pe = pe.at[:, 1::2].set(jnp.cos(position * div_term))
    return pe


# ---------------------------------------------------------------------------
# Pallas kernels (pure jnp ops -> lower on Mosaic and on the interpret path)
# ---------------------------------------------------------------------------
def _add_kernel_2d(x_ref, pe_ref, o_ref):
    # Dense 2-D (rows, lanes) tiles; PE pre-cast to x.dtype in the wrapper.
    o_ref[...] = x_ref[...] + pe_ref[...]


def _add_kernel_3d(x_ref, pe_ref, o_ref):
    # x block (S, tb, H); PE block (S, H) broadcast across the batch sublanes.
    o_ref[...] = x_ref[...] + pe_ref[...][:, None, :]


def _add_dropout_kernel_2d(x_ref, pe_ref, keep_ref, o_ref, *, scale):
    y = x_ref[...] + pe_ref[...]
    o_ref[...] = y * (keep_ref[...] * jnp.asarray(scale, y.dtype))


def _add_dropout_kernel_3d(x_ref, pe_ref, keep_ref, o_ref, *, scale):
    y = x_ref[...] + pe_ref[...][:, None, :]
    o_ref[...] = y * (keep_ref[...] * jnp.asarray(scale, y.dtype))


# ---------------------------------------------------------------------------
# Tiling helpers
# ---------------------------------------------------------------------------
def _sublane_pack(itemsize: int) -> int:
    # 8 for f32, 16 for bf16, 32 for int8/fp8.
    return max(8, 32 // itemsize)


def _round_seq_tile(ts: int, seq_len: int, pack: int) -> int:
    if ts >= seq_len:
        return seq_len
    ts = max(pack, (ts // pack) * pack)
    return min(ts, seq_len)            # ts == seq_len is always legal (full dim)


# ---------------------------------------------------------------------------
# Wrapper
# ---------------------------------------------------------------------------
def positional_encoding_forward(
    x: jnp.ndarray,
    pe_table: jnp.ndarray,
    *,
    dropout_rate: float = 0.1,
    training: bool = False,
    rng_key=None,
    target_block_bytes: int = 4 * 1024 * 1024,
    vmem_limit_bytes: int = 32 * 1024 * 1024,
) -> jnp.ndarray:
    """x: (seq_len, batch, hidden). Returns x + PE[:seq_len] (+ dropout if training)."""
    S, B, H = x.shape
    L, Hp = pe_table.shape
    assert H == Hp, f"hidden dim mismatch: x has {H}, PE table has {Hp}"
    assert S <= L, f"seq_len {S} exceeds PE table max_length {L}"

    # Cast once here (matches `type_as(x)`): no per-tile VPU cast, halves PE
    # HBM/VMEM bytes when x is bf16.  (Small numeric deviation vs torch's
    # fp32-buffer promotion for low-precision x.)
    pe = pe_table[:S].astype(x.dtype)                       # (S, H)

    use_dropout = bool(training) and float(dropout_rate) > 0.0
    if use_dropout:
        if rng_key is None:
            rng_key = jax.random.PRNGKey(0)
        keep_prob = 1.0 - float(dropout_rate)
        scale = 1.0 / keep_prob
        # Wrapper-side Bernoulli keep-mask (0/1 in x.dtype); the scale+mask is
        # fused in the kernel.  TODO(synk): use pltpu.prng_seed/prng_random_bits
        # in-kernel on real TPU to avoid this extra S*B*H HBM read.
        keep = jax.random.bernoulli(rng_key, keep_prob, (S, B, H)).astype(x.dtype)

    itemsize = jnp.dtype(x.dtype).itemsize
    pack = _sublane_pack(itemsize)
    # Keep (double-buffered operands) * block under ~3/4 of the scoped limit.
    n_ops = 4 if use_dropout else 3                         # x, pe, (mask,) out
    block_budget = min(
        int(target_block_bytes),
        max(pack * 128 * itemsize, (vmem_limit_bytes * 3 // 4) // (2 * n_ops)),
    )

    elems = S * B * H
    cost = pl.CostEstimate(
        flops=(3 * elems if use_dropout else elems),
        transcendentals=0,
        bytes_accessed=(2 * elems + S * H) * itemsize
        + (elems * itemsize if use_dropout else 0),
    )
    out_shape = jax.ShapeDtypeStruct((S, B, H), x.dtype)

    # ----------------------------------------------------------------------
    # Path B: H not lane-aligned (e.g. H=32) -> flatten batch into the lanes.
    # A row-major reshape (S, B, H) -> (S, B*H) is free, makes every DMA row
    # contiguous and every store an unmasked, lane-dense vst.
    # ----------------------------------------------------------------------
    if H % 128 != 0:
        BH = B * H
        x2 = x.reshape(S, BH)
        # PE broadcast over batch, flattened the same way.  The table slice is
        # tiny at these model sizes; for very large B*H, tile PE in-kernel
        # instead to keep its HBM traffic at S*H.
        pe2 = jnp.tile(pe, (1, B))                          # (S, B*H)

        ts = _round_seq_tile(max(1, block_budget // (BH * itemsize)), S, pack)
        grid = (pl.cdiv(S, ts),)
        blk = pl.BlockSpec((ts, BH), lambda si: (si, 0))
        compiler_params = pltpu.CompilerParams(
            dimension_semantics=("parallel",),
            vmem_limit_bytes=vmem_limit_bytes,
        )
        flat_shape = jax.ShapeDtypeStruct((S, BH), x.dtype)

        if use_dropout:
            out2 = pl.pallas_call(
                functools.partial(_add_dropout_kernel_2d, scale=scale),
                out_shape=flat_shape,
                grid=grid,
                in_specs=[blk, blk, blk],
                out_specs=blk,
                compiler_params=compiler_params,
                cost_estimate=cost,
            )(x2, pe2, keep.reshape(S, BH))
        else:
            out2 = pl.pallas_call(
                _add_kernel_2d,
                out_shape=flat_shape,
                grid=grid,
                in_specs=[blk, blk],
                out_specs=blk,
                compiler_params=compiler_params,
                cost_estimate=cost,
            )(x2, pe2)
        return out2.reshape(S, B, H)

    # ----------------------------------------------------------------------
    # Path A: H is a multiple of 128 (already lane-dense).
    #   A2 (batch folded):  whole seq fits a block -> block (S, tb, H) so the
    #       grid is a few large steps instead of B tiny ones.
    #   A1 (squeezed batch): tile over seq; batch is the *inner* grid axis so
    #       the PE block index is constant across consecutive steps (no PE
    #       re-DMA: its HBM traffic stays S*H, not S*B*H).
    # ----------------------------------------------------------------------
    row_bytes = H * itemsize
    rows = max(1, block_budget // row_bytes)                # (seq*batch) rows / block
    tb_cand = rows // S if rows >= S else 0
    fold_batch = (B > 1) and (tb_cand >= B or tb_cand >= pack)

    if fold_batch:
        ts = S
        tb = B if tb_cand >= B else (tb_cand // pack) * pack
        grid = (pl.cdiv(S, ts), pl.cdiv(B, tb))
        x_spec = pl.BlockSpec((ts, tb, H), lambda si, bi: (si, bi, 0))
        pe_spec = pl.BlockSpec((ts, H), lambda si, bi: (si, 0))
        dims = ("arbitrary", "parallel")                    # batch blocks independent
        kern_add, kern_drop = _add_kernel_3d, _add_dropout_kernel_3d
    else:
        ts = _round_seq_tile(min(S, rows), S, pack)
        grid = (pl.cdiv(S, ts), B)
        x_spec = pl.BlockSpec((ts, None, H), lambda si, bi: (si, bi, 0))
        pe_spec = pl.BlockSpec((ts, H), lambda si, bi: (si, 0))
        # Seq axis "parallel", batch axis "arbitrary": a v7x megacore split
        # along seq keeps the PE-block-constant-across-inner-steps property.
        dims = ("parallel", "arbitrary")
        kern_add, kern_drop = _add_kernel_2d, _add_dropout_kernel_2d

    compiler_params = pltpu.CompilerParams(
        dimension_semantics=dims,
        vmem_limit_bytes=vmem_limit_bytes,
    )

    if use_dropout:
        return pl.pallas_call(
            functools.partial(kern_drop, scale=scale),
            out_shape=out_shape,
            grid=grid,
            in_specs=[x_spec, pe_spec, x_spec],
            out_specs=x_spec,
            compiler_params=compiler_params,
            cost_estimate=cost,
        )(x, pe, keep)

    return pl.pallas_call(
        kern_add,
        out_shape=out_shape,
        grid=grid,
        in_specs=[x_spec, pe_spec],
        out_specs=x_spec,
        compiler_params=compiler_params,
        cost_estimate=cost,
    )(x, pe)


# ---------------------------------------------------------------------------
# Main
# ---------------------------------------------------------------------------
if __name__ == "__main__":
    MAX_LENGTH = 500

    def reference(x, pe_table):
        return x + pe_table[: x.shape[0]].astype(x.dtype)[:, None, :]

    key = jax.random.PRNGKey(0)
    kx, kd = jax.random.split(key)

    # --- Path B (H < 128): module-default small shape, eval mode -----------
    S, B, H = 8, 2, 32
    pe_table = make_positional_encoder(MAX_LENGTH, H)
    x = jax.random.normal(kx, (S, B, H), dtype=jnp.float32)
    out = jax.block_until_ready(
        positional_encoding_forward(x, pe_table, dropout_rate=0.1, training=False))
    ref = reference(x, pe_table)
    assert out.shape == (S, B, H)
    assert jnp.allclose(out, ref, atol=1e-6, rtol=1e-6)

    # --- Path B, training mode (inverted dropout fused in the kernel) ------
    p = 0.25
    out_tr = jax.block_until_ready(
        positional_encoding_forward(x, pe_table, dropout_rate=p, training=True,
                                    rng_key=kd))
    kept = out_tr != 0.0
    scaled_ref = ref / (1.0 - p)
    assert jnp.allclose(jnp.where(kept, out_tr, scaled_ref), scaled_ref,
                        atol=1e-5, rtol=1e-5)
    drop_frac = float(1.0 - jnp.mean(kept.astype(jnp.float32)))
    assert 0.02 < drop_frac < 0.6, drop_frac

    # --- Path B with seq tiling + ragged final block ------------------------
    S2 = 24
    x2 = jax.random.normal(jax.random.PRNGKey(1), (S2, B, H), dtype=jnp.float32)
    out2 = jax.block_until_ready(
        positional_encoding_forward(x2, pe_table, training=False,
                                    target_block_bytes=4 * 1024))
    assert jnp.allclose(out2, reference(x2, pe_table), atol=1e-6, rtol=1e-6)

    # --- Path A1 (lane-dense H, seq-tiled, squeezed batch) ------------------
    S3, B3, H3 = 64, 2, 128
    pe_table3 = make_positional_encoder(MAX_LENGTH, H3)
    x3 = jax.random.normal(jax.random.PRNGKey(2), (S3, B3, H3), dtype=jnp.float32)
    out3 = jax.block_until_ready(
        positional_encoding_forward(x3, pe_table3, training=False,
                                    target_block_bytes=16 * 1024))
    assert jnp.allclose(out3, reference(x3, pe_table3), atol=1e-6, rtol=1e-6)

    # --- Path A2 (small S, batch folded into the block), eval + training ----
    S4, B4, H4 = 8, 4, 128
    pe_table4 = make_positional_encoder(MAX_LENGTH, H4)
    x4 = jax.random.normal(jax.random.PRNGKey(3), (S4, B4, H4), dtype=jnp.float32)
    ref4 = reference(x4, pe_table4)
    out4 = jax.block_until_ready(
        positional_encoding_forward(x4, pe_table4, training=False,
                                    target_block_bytes=16 * 1024))
    assert jnp.allclose(out4, ref4, atol=1e-6, rtol=1e-6)
    out4t = jax.block_until_ready(
        positional_encoding_forward(x4, pe_table4, dropout_rate=p, training=True,
                                    rng_key=jax.random.PRNGKey(4),
                                    target_block_bytes=16 * 1024))
    kept4 = out4t != 0.0
    sref4 = ref4 / (1.0 - p)
    assert jnp.allclose(jnp.where(kept4, out4t, sref4), sref4, atol=1e-5, rtol=1e-5)

    print("KERNEL_OK")
</pallas_src>

<mosaic_0001>
module attributes {stable_mosaic.version = 11 : i64} {
  func.func @_add_kernel_2d(%arg0: i32, %arg1: memref<8x64xf32, #tpu.memory_space<vmem>>, %arg2: memref<8x64xf32, #tpu.memory_space<vmem>>, %arg3: memref<8x64xf32, #tpu.memory_space<vmem>>) attributes {dimension_semantics = [#tpu.dimension_semantics<parallel>], iteration_bounds = array<i64: 1>, scalar_prefetch = 0 : i64, scratch_operands = 0 : i64, tpu.core_type = #tpu.core_type<tc>, window_params = [{transform_indices = @transform_0, window_bounds = array<i64: 8, 64>}, {transform_indices = @transform_1, window_bounds = array<i64: 8, 64>}, {transform_indices = @transform_2, window_bounds = array<i64: 8, 64>}]} {
    %c0 = arith.constant 0 : index
    %c0_0 = arith.constant 0 : index
    %0 = vector.load %arg1[%c0, %c0_0] : memref<8x64xf32, #tpu.memory_space<vmem>>, vector<8x64xf32>
    %c0_1 = arith.constant 0 : index
    %c0_2 = arith.constant 0 : index
    %1 = vector.load %arg2[%c0_1, %c0_2] : memref<8x64xf32, #tpu.memory_space<vmem>>, vector<8x64xf32>
    %2 = arith.addf %0, %1 : vector<8x64xf32>
    %c0_3 = arith.constant 0 : index
    %c0_4 = arith.constant 0 : index
    %3 = vector.load %arg3[%c0_3, %c0_4] : memref<8x64xf32, #tpu.memory_space<vmem>>, vector<8x64xf32>
    tpu.vector_store %arg3[%c0_3, %c0_4], %2 {strides = array<i32>} : memref<8x64xf32, #tpu.memory_space<vmem>>, vector<8x64xf32>,
    return
  }
  func.func @transform_0(%arg0: i32) -> (i32, i32) {
    %c0_i32 = arith.constant 0 : i32
    %c0_i32_0 = arith.constant 0 : i32
    return %arg0, %c0_i32 : i32, i32
  }
  func.func @transform_1(%arg0: i32) -> (i32, i32) {
    %c0_i32 = arith.constant 0 : i32
    %c0_i32_0 = arith.constant 0 : i32
    return %arg0, %c0_i32 : i32, i32
  }
  func.func @transform_2(%arg0: i32) -> (i32, i32) {
    %c0_i32 = arith.constant 0 : i32
    %c0_i32_0 = arith.constant 0 : i32
    return %arg0, %c0_i32 : i32, i32
  }
}

</mosaic_0001>

<llo_original>
// kernel: tpu_custom_call.1
$region0: #{tpu_custom_call.1}
  #allocation0 [shape = 'u32[]', space=smem, size = 0x4, offset = 0x4, fixed_abs, tag = 'smem constant byte address 0x4 - core index']
  #allocation1 [shape = 'u32[144,128]{1,0:T(1,128)}', space=vmem, size = 0x12000, scoped, tag = 'internal scratch']
  %s0 = inlined_call_operand.hbm [shape: f32[8,64], index: 0, kind: input, shape index: {}]
  %s1 = inlined_call_operand.hbm [shape: f32[8,64], index: 1, kind: input, shape index: {}]
  %s2 = inlined_call_operand.hbm [shape: f32[8,64], index: 2, kind: output, shape index: {}]
  %s3 = sld [smem:[#allocation0]]
  $region26: #{tpu_custom_call.1} parent=0
    _
  %s5 = ssub.s32 1, %s3
  %s6 = scalar_select 0, %s5, %s3
  $region1: #{tpu_custom_call.1} parent=0
    #allocation2 [shape = 'u8[4096]{0}', space=vmem, size = 0x1000, scoped, tag = 'input window, operand 0, single buffered']
    #allocation3 [shape = 's32[1]{0}', space=sflag, size = 0x4, scoped, tag = 'scoped memory for tpu_custom_call.1']
    #allocation4 [shape = 's32[1]{0}', space=sflag, size = 0x4, scoped, tag = 'scoped memory for tpu_custom_call.1']
    #allocation5 [shape = 'u8[4096]{0}', space=vmem, size = 0x1000, scoped, tag = 'input window, operand 1, single buffered']
    #allocation6 [shape = 's32[1]{0}', space=sflag, size = 0x4, scoped, tag = 'scoped memory for tpu_custom_call.1']
    #allocation7 [shape = 'u8[4096]{0}', space=vmem, size = 0x1000, scoped, tag = 'output window, operand 0, single buffered']
    %7 = vsyncpa [#allocation3], 0
    %8 = vsyncpa [#allocation6], 0
    %9 = vsyncpa [#allocation4], 0
    // Predicated region
    $region2: #{tpu_custom_call.1} parent=1 // pred_check
      _
    $region3: #{tpu_custom_call.1} parent=1 // pred_check_branch
      %11 = sbr.rel (0) target = $region5
    $region4: #{tpu_custom_call.1} parent=1 // pred_region
      %s13 = ssub.s32 128, 128
      %14 = vsyncadd [#allocation3], %s13
      %s16 = sshll.u32 [#allocation2], 4
      %s17 = int_to_ptr.vmem [resolvable:$true] %s16
      %19 = dma.hbm_to_vmem [thread:$0]  %s0, 128, %s17, [#allocation3]
    $region5: #{tpu_custom_call.1} parent=1 // pred_fallthru
      _
    // Predicated region
    $region6: #{tpu_custom_call.1} parent=1 // pred_check
      _
    $region7: #{tpu_custom_call.1} parent=1 // pred_check_branch
      %21 = sbr.rel (0) target = $region9
    $region8: #{tpu_custom_call.1} parent=1 // pred_region
      %s23 = ssub.s32 128, 128
      %24 = vsyncadd [#allocation6], %s23
      %s26 = sshll.u32 [#allocation5], 4
      %s27 = int_to_ptr.vmem [resolvable:$true] %s26
      %29 = dma.hbm_to_vmem [thread:$0]  %s1, 128, %s27, [#allocation6]
    $region9: #{tpu_custom_call.1} parent=1 // pred_fallthru
      _
    // Predicated region
    $region10: #{tpu_custom_call.1} parent=1 // pred_check
      _
    $region11: #{tpu_custom_call.1} parent=1 // pred_check_branch
      %31 = sbr.rel (0) target = $region13
    $region12: #{tpu_custom_call.1} parent=1 // pred_region
      %32 = dma.done [#allocation3], 128
    $region13: #{tpu_custom_call.1} parent=1 // pred_fallthru
      _
    // Predicated region
    $region14: #{tpu_custom_call.1} parent=1 // pred_check
      _
    $region15: #{tpu_custom_call.1} parent=1 // pred_check_branch
      %34 = sbr.rel (0) target = $region17
    $region16: #{tpu_custom_call.1} parent=1 // pred_region
      %35 = dma.done [#allocation6], 128
    $region17: #{tpu_custom_call.1} parent=1 // pred_fallthru
      _
    %v36 = vld [vmem:[#allocation2] sm:$0xff]
    %v37 = vld [vmem:[#allocation5] sm:$0xff]
    %v38 = vadd.f32 %v36, %v37
    %vm39 = vcmask 523264
    %40 = vst.msk [vmem:[#allocation7] sm:$0xff] %vm39, %v38
    // Predicated region
    $region18: #{tpu_custom_call.1} parent=1 // pred_check
      _
    $region19: #{tpu_custom_call.1} parent=1 // pred_check_branch
      %42 = sbr.rel (0) target = $region21
    $region20: #{tpu_custom_call.1} parent=1 // pred_region
      %s44 = ssub.s32 128, 128
      %45 = vsyncadd [#allocation4], %s44
      %s47 = sshll.u32 [#allocation7], 4
      %s48 = int_to_ptr.vmem [resolvable:$true] %s47
      %50 = dma.vmem_to_hbm [thread:$0]  %s48, 128, %s2, [#allocation4]
    $region21: #{tpu_custom_call.1} parent=1 // pred_fallthru
      _
    // Predicated region
    $region22: #{tpu_custom_call.1} parent=1 // pred_check
      _
    $region23: #{tpu_custom_call.1} parent=1 // pred_check_branch
      %52 = sbr.rel (0) target = $region25
    $region24: #{tpu_custom_call.1} parent=1 // pred_region
      %53 = dma.done [#allocation4], 128
    $region25: #{tpu_custom_call.1} parent=1 // pred_fallthru
      _
    %54 = vsyncpa [#allocation3], 1
    %55 = vsyncpa [#allocation6], 1
    %56 = vsyncpa [#allocation4], 1

</llo_original>
